<compile_context>
chip_gen: v5e
topology: v5e:2x2
jax: 0.10.0
libtpu: 0.0.40
codegen_flags: <defaults>
</compile_context>

<pallas_src>
import jax
import jax.numpy as jnp
from jax.experimental import pallas as pl
from jax.experimental.pallas import tpu as pltpu  # noqa: F401  (TPU backend import)


def _identity_kernel(x_ref, o_ref):
    # o_ref is aliased onto x_ref's HBM buffer (input_output_aliases={0: 0}),
    # so the output already contains the input bytes. Nothing to do.
    del x_ref, o_ref


def identity(x: jax.Array) -> jax.Array:
    """Pallas identity: returns an array equal to ``x`` (same shape & dtype).

    Zero-copy when the input is donated under jit
    (``jax.jit(identity, donate_argnums=0)``); otherwise XLA inserts a single
    flat device copy to satisfy the output alias. Do not assume strict
    aliasing semantics from the caller's side unless donating.
    """
    if x.ndim == 0:
        # Scalar guard: Pallas refs want rank >= 1. Only the 0-d path pays
        # the reshape round-trip.
        return identity(x.reshape(1)).reshape(())

    return pl.pallas_call(
        _identity_kernel,
        out_shape=jax.ShapeDtypeStruct(x.shape, x.dtype),
        in_specs=[pl.BlockSpec(memory_space=pl.ANY)],   # raw HBM ref, no auto-DMA
        out_specs=pl.BlockSpec(memory_space=pl.ANY),    # raw HBM ref, no auto-DMA
        input_output_aliases={0: 0},                    # output buffer IS the input buffer
    )(x)


if __name__ == "__main__":
    key = jax.random.PRNGKey(0)
    # NCHW input, small shape: batch=2, channels=4, spatial=16x16
    x = jax.random.normal(key, (2, 4, 16, 16), dtype=jnp.float32)

    # Non-donated eager call: XLA inserts one defensive copy, so x remains
    # valid and can be compared against directly.
    y = identity(x)
    jax.block_until_ready(y)

    assert y.shape == x.shape, (y.shape, x.shape)
    assert y.dtype == x.dtype, (y.dtype, x.dtype)
    assert bool(jnp.all(y == x)), "identity kernel output mismatch"

    print("KERNEL_OK")
</pallas_src>

<mosaic_0001>
module attributes {stable_mosaic.version = 11 : i64} {
  func.func @_identity_kernel(%arg0: memref<2x4x16x16xf32, #tpu.memory_space<any>>, %arg1: memref<2x4x16x16xf32, #tpu.memory_space<any>>) attributes {dimension_semantics = [], scalar_prefetch = 0 : i64, scratch_operands = 0 : i64, tpu.core_type = #tpu.core_type<tc>} {
    return
  }
}

</mosaic_0001>

<llo_original>
// kernel: tpu_custom_call.1
$region0: #{tpu_custom_call.1}
  #allocation0 [shape = 'u32[]', space=smem, size = 0x4, offset = 0x4, fixed_abs, tag = 'smem constant byte address 0x4 - core index']
  #allocation1 [shape = 'u32[72,128]{1,0:T(1,128)}', space=vmem, size = 0x9000, scoped, tag = 'internal scratch']
  %s0 = inlined_call_operand.hbm [shape: f32[2,4,16,16], index: 0, kind: input, shape index: {}, may-alias: {0,1}]
  %s1 = inlined_call_operand.hbm [shape: f32[2,4,16,16], index: 1, kind: output, shape index: {}, may-alias: {0,1}]
  %s2 = sld [smem:[#allocation0]]
  $region2: #{tpu_custom_call.1} parent=0
    _
  %s4 = ssub.s32 1, %s2
  %s5 = scalar_select 0, %s4, %s2

</llo_original>
